<compile_context>
chip_gen: v5e
topology: v5e:2x2
jax: 0.10.0
libtpu: 0.0.40
codegen_flags: <defaults>
</compile_context>

<pallas_src>
import jax
import jax.numpy as jnp
from jax import lax
from jax.experimental import pallas as pl
from jax.experimental.pallas import tpu as pltpu


_VMEM = pl.BlockSpec(memory_space=pltpu.MemorySpace.VMEM)
_SMEM = pl.BlockSpec(memory_space=pltpu.MemorySpace.SMEM)


# ---------------------------------------------------------------------------
# Fused kernel: init_enc + full Euler time loop.
#
#   dxdt(x) = clamp( f(x) + GraphSAGE(x, A), -1000, 1000 )
#     f:  Linear(F->H) -> ReLU -> (Dropout=id) -> Linear(H->F)
#     g:  SAGEConv(F->H) -> ReLU -> SAGEConv(H->F)
#         SAGEConv(x) = mean_neigh(x) @ Wl + bl + x @ Wr
#
#   Packed weights (built once in the wrapper):
#     W_a = [[f_w1 | g1_wr],          [2F, 2H]
#            [  0  | g1_wl]]
#     b_a = [f_b1 | g1_bl]            [1, 2H]
#     W_b = [f_w2 ; g2_wr ; 0 ; g2_wl][4H, F]
#     b_b = f_b2 + g2_bl              [1, F]
#   so per step (2 projection matmuls + 2 aggregation matmuls):
#     m1    = anorm @ x
#     h_all = relu([x | m1] @ W_a + b_a)         = [relu(f1(x)) | relu(sage1(x))]
#     m_all = anorm @ h_all
#     dx    = [h_all | m_all] @ W_b + b_b        = f(x) + g(x)
# ---------------------------------------------------------------------------
def _backbone_kernel(
    dts_ref,          # SMEM  [horizon-1]
    xp_ref,           # VMEM  [N, F*L]
    anorm_ref,        # VMEM  [N, N]
    ew1_ref,          # VMEM  [F*L, F*H]   (kron(I_F, enc_w1))
    eb1_ref,          # VMEM  [1, F*H]
    ew2_ref,          # VMEM  [F*H, F]     (kron(I_F, enc_w2))
    eb2_ref,          # VMEM  [1, F]
    wa_ref,           # VMEM  [2F, 2H]     (merged "in" projection)
    ba_ref,           # VMEM  [1, 2H]
    wb_ref,           # VMEM  [4H, F]      (merged "out" projection)
    bb_ref,           # VMEM  [1, F]
    out_ref,          # VMEM  [horizon, N, F]
):
    horizon, n, f = out_ref.shape
    two_h = wa_ref.shape[1]

    # ---- load all loop-invariant operands once; hoist bias broadcasts ----
    a = anorm_ref[...]
    w_a = wa_ref[...]
    w_b = wb_ref[...]
    b_a = jnp.broadcast_to(ba_ref[...], (n, two_h))
    b_b = jnp.broadcast_to(bb_ref[...], (n, f))

    # ---- init_enc: Linear(L->H) -> ReLU -> (Dropout=id) -> Linear(H->1) ----
    # Block-diagonal packing handles all (node, feature) lookback series in
    # two matmuls and yields x0 directly as [N, F] (no reshape, no masked
    # width-1 store).  Fine at F=8; switch to a [N*F, L] formulation if F grows.
    h0 = jnp.maximum(
        jnp.dot(xp_ref[...], ew1_ref[...], preferred_element_type=jnp.float32)
        + eb1_ref[...],
        0.0,
    )
    x0 = jnp.dot(h0, ew2_ref[...], preferred_element_type=jnp.float32) + eb2_ref[...]
    out_ref[0] = x0

    def dxdt(x):
        m1 = jnp.dot(a, x, preferred_element_type=jnp.float32)            # [N, F]
        xm = jnp.concatenate([x, m1], axis=1)                             # [N, 2F]
        h_all = jnp.maximum(
            jnp.dot(xm, w_a, preferred_element_type=jnp.float32) + b_a,
            0.0,
        )                                                                  # [N, 2H]
        m_all = jnp.dot(a, h_all, preferred_element_type=jnp.float32)      # [N, 2H]
        hm = jnp.concatenate([h_all, m_all], axis=1)                       # [N, 4H]
        dx = jnp.dot(hm, w_b, preferred_element_type=jnp.float32) + b_b    # [N, F]
        return jnp.clip(dx, -1000.0, 1000.0)

    # ---- explicit Euler over the tspan grid, state carried in vregs ----
    # TODO(synk): other torchdiffeq methods (e.g. dopri5 adaptive stepping)
    # are not reproduced; fixed-grid Euler is used.
    def euler_step(i, x):
        x_new = x + dts_ref[i] * dxdt(x)
        out_ref[i + 1] = x_new
        return x_new

    steps = horizon - 1
    unroll = True if steps <= 4 else 4   # cap unroll for long horizons
    lax.fori_loop(0, steps, euler_step, x0, unroll=unroll)


# ---------------------------------------------------------------------------
# Wrapper
# ---------------------------------------------------------------------------
def _padded_vmem_bytes(shape, itemsize=4):
    """Bytes of an f32 array padded to (8, 128) tiles on its last two dims."""
    shape = tuple(int(s) for s in shape)
    if len(shape) < 2:
        shape = (1,) * (2 - len(shape)) + shape
    lead = 1
    for s in shape[:-2]:
        lead *= s
    r = -(-shape[-2] // 8) * 8
    c = -(-shape[-1] // 128) * 128
    return lead * r * c * itemsize


def backbone_ode_forward(tspan, x, anorm, packed):
    """
    tspan: [horizon], x: [lookback, N, feature_dim], anorm: [N, N] (precomputed)
    packed: packed parameter dict (see pack_params)
    returns: [horizon, N, feature_dim]
    """
    lookback, n, f = x.shape
    horizon = int(tspan.shape[0])

    # x.permute(1, 2, 0) flattened per node: row n = [f0 lookback..., f1 lookback...].
    xp = jnp.transpose(x, (1, 2, 0)).reshape(n, f * lookback)
    dts = (tspan[1:] - tspan[:-1]).astype(jnp.float32)

    vmem_operands = (
        xp, anorm,
        packed["enc_w1"], packed["enc_b1"], packed["enc_w2"], packed["enc_b2"],
        packed["w_a"], packed["b_a"], packed["w_b"], packed["b_b"],
    )

    # ---- advisory cost estimate for the XLA scheduler ----
    steps = horizon - 1
    h2 = int(packed["b_a"].shape[1])       # 2H
    h4 = int(packed["w_b"].shape[0])       # 4H
    flops = (
        2 * n * (f * lookback) * int(packed["enc_w1"].shape[1])   # enc matmul 1
        + 2 * n * int(packed["enc_w2"].shape[0]) * f               # enc matmul 2
        + steps * (
            2 * n * n * f          # anorm @ x
            + 2 * n * (2 * f) * h2 # [x|m1] @ W_a
            + 2 * n * n * h2       # anorm @ h_all
            + 2 * n * h4 * f       # [h_all|m_all] @ W_b
        )
    )
    bytes_accessed = (
        sum(int(op.size) * 4 for op in vmem_operands)
        + horizon * n * f * 4
        + max(steps, 0) * 4
    )
    cost = pl.CostEstimate(flops=int(flops), transcendentals=0,
                           bytes_accessed=int(bytes_accessed))

    # ---- VMEM limit sized to the actual resident footprint (+ margin) ----
    resident = (sum(_padded_vmem_bytes(op.shape) for op in vmem_operands)
                + _padded_vmem_bytes((horizon, n, f)))
    vmem_limit = min(max(2 * resident + (4 << 20), 32 << 20), 64 << 20)

    return pl.pallas_call(
        _backbone_kernel,
        out_shape=jax.ShapeDtypeStruct((horizon, n, f), jnp.float32),
        in_specs=[_SMEM] + [_VMEM] * len(vmem_operands),
        out_specs=_VMEM,
        compiler_params=pltpu.CompilerParams(vmem_limit_bytes=int(vmem_limit)),
        cost_estimate=cost,
    )(dts, *vmem_operands)


def compute_anorm(adj_w):
    """PyG-style mean aggregation matrix (precompute once per graph):
    target j averages sources i with adj[i, j] != 0; zero in-degree -> zero."""
    mask_t = (adj_w != 0).astype(jnp.float32).T          # [target, source]
    deg = jnp.sum(mask_t, axis=1, keepdims=True)
    return jnp.where(deg > 0, mask_t / jnp.maximum(deg, 1.0), 0.0)


# ---------------------------------------------------------------------------
# Parameter construction (deterministic, PyTorch nn.Linear-style init).
# Weights are stored transposed: [in_dim, out_dim]; biases as [1, out_dim].
# ---------------------------------------------------------------------------
def _linear(key, in_dim, out_dim, bias=True):
    kw, kb = jax.random.split(key)
    bound = 1.0 / (in_dim ** 0.5)
    w = jax.random.uniform(kw, (in_dim, out_dim), jnp.float32, -bound, bound)
    b = (
        jax.random.uniform(kb, (1, out_dim), jnp.float32, -bound, bound)
        if bias
        else None
    )
    return w, b


def init_params(key, lookback, feature_dim, ode_hid_dim):
    ks = jax.random.split(key, 8)
    p = {}
    # init_enc: Linear(lookback -> H), Linear(H -> 1)
    p["enc_w1"], p["enc_b1"] = _linear(ks[0], lookback, ode_hid_dim)
    p["enc_w2"], p["enc_b2"] = _linear(ks[1], ode_hid_dim, 1)
    # f: Linear(F -> H), Linear(H -> F)
    p["f_w1"], p["f_b1"] = _linear(ks[2], feature_dim, ode_hid_dim)
    p["f_w2"], p["f_b2"] = _linear(ks[3], ode_hid_dim, feature_dim)
    # g.conv1: SAGEConv(F -> H)  (lin_l has bias, lin_r does not)
    p["g1_wl"], p["g1_bl"] = _linear(ks[4], feature_dim, ode_hid_dim)
    p["g1_wr"], _ = _linear(ks[5], feature_dim, ode_hid_dim, bias=False)
    # g.conv2: SAGEConv(H -> F)
    p["g2_wl"], p["g2_bl"] = _linear(ks[6], ode_hid_dim, feature_dim)
    p["g2_wr"], _ = _linear(ks[7], ode_hid_dim, feature_dim, bias=False)
    return p


def pack_params(p, lookback, feature_dim, ode_hid_dim):
    """Pre-concatenate / block-diagonalize weights so the kernel's inner loop
    is two aggregation matmuls plus two merged projection matmuls, with no
    in-kernel weight concat/slice/reshape."""
    f, h = feature_dim, ode_hid_dim
    packed = {}
    # init_enc: block-diagonal packing over the F independent feature series.
    packed["enc_w1"] = jnp.kron(jnp.eye(f, dtype=jnp.float32), p["enc_w1"])  # [F*L, F*H]
    packed["enc_b1"] = jnp.tile(p["enc_b1"], (1, f))                          # [1, F*H]
    packed["enc_w2"] = jnp.kron(jnp.eye(f, dtype=jnp.float32), p["enc_w2"])  # [F*H, F]
    packed["enc_b2"] = jnp.tile(p["enc_b2"], (1, f))                          # [1, F]
    # dxdt "in" projection, merged over K = [x | m1]:
    #   W_a = [[f_w1, g1_wr], [0, g1_wl]]    -> [2F, 2H]
    w_xa = jnp.concatenate([p["f_w1"], p["g1_wr"]], axis=1)                   # [F, 2H]
    w_ma = jnp.concatenate([jnp.zeros((f, h), jnp.float32), p["g1_wl"]], axis=1)
    packed["w_a"] = jnp.concatenate([w_xa, w_ma], axis=0)                     # [2F, 2H]
    packed["b_a"] = jnp.concatenate([p["f_b1"], p["g1_bl"]], axis=1)          # [1, 2H]
    # dxdt "out" projection, merged over K = [h_all | m_all]; f(x)+g(x) is the
    # K-reduction.  K = 4H (= 128 for H=32: one full MXU K pass).
    w_hb = jnp.concatenate([p["f_w2"], p["g2_wr"]], axis=0)                   # [2H, F]
    w_mb = jnp.concatenate([jnp.zeros((h, f), jnp.float32), p["g2_wl"]], axis=0)
    packed["w_b"] = jnp.concatenate([w_hb, w_mb], axis=0)                     # [4H, F]
    packed["b_b"] = p["f_b2"] + p["g2_bl"]                                    # [1, F]
    return packed


if __name__ == "__main__":
    key = jax.random.PRNGKey(0)
    lookback, num_supernodes, feature_dim, ode_hid_dim, horizon = 8, 16, 8, 32, 4

    k_x, k_m, k_w, k_p = jax.random.split(key, 4)
    x = jax.random.normal(k_x, (lookback, num_supernodes, feature_dim), jnp.float32)
    adj_w = (
        (jax.random.uniform(k_m, (num_supernodes, num_supernodes)) > 0.6).astype(jnp.float32)
        * jax.random.uniform(k_w, (num_supernodes, num_supernodes))
    )
    tspan = jnp.linspace(0.0, 1.0, horizon)

    params = init_params(k_p, lookback, feature_dim, ode_hid_dim)
    packed = pack_params(params, lookback, feature_dim, ode_hid_dim)
    anorm = compute_anorm(adj_w)   # constant per graph; precomputed once

    out = backbone_ode_forward(tspan, x, anorm, packed)
    out = jax.block_until_ready(out)

    assert out.shape == (horizon, num_supernodes, feature_dim)
    assert bool(jnp.all(jnp.isfinite(out)))
    print("KERNEL_OK")
</pallas_src>

<mosaic_0001>
module attributes {stable_mosaic.version = 11 : i64} {
  func.func @_backbone_kernel(%arg0: memref<3xf32, #tpu.memory_space<smem>>, %arg1: memref<16x64xf32, #tpu.memory_space<vmem>>, %arg2: memref<16x16xf32, #tpu.memory_space<vmem>>, %arg3: memref<64x256xf32, #tpu.memory_space<vmem>>, %arg4: memref<1x256xf32, #tpu.memory_space<vmem>>, %arg5: memref<256x8xf32, #tpu.memory_space<vmem>>, %arg6: memref<1x8xf32, #tpu.memory_space<vmem>>, %arg7: memref<16x64xf32, #tpu.memory_space<vmem>>, %arg8: memref<1x64xf32, #tpu.memory_space<vmem>>, %arg9: memref<128x8xf32, #tpu.memory_space<vmem>>, %arg10: memref<1x8xf32, #tpu.memory_space<vmem>>, %arg11: memref<4x16x8xf32, #tpu.memory_space<vmem>>) attributes {dimension_semantics = [], scalar_prefetch = 0 : i64, scratch_operands = 0 : i64, tpu.core_type = #tpu.core_type<tc>} {
    %c0 = arith.constant 0 : index
    %c0_0 = arith.constant 0 : index
    %0 = vector.load %arg2[%c0, %c0_0] : memref<16x16xf32, #tpu.memory_space<vmem>>, vector<16x16xf32>
    %c0_1 = arith.constant 0 : index
    %c0_2 = arith.constant 0 : index
    %1 = vector.load %arg7[%c0_1, %c0_2] : memref<16x64xf32, #tpu.memory_space<vmem>>, vector<16x64xf32>
    %c0_3 = arith.constant 0 : index
    %c0_4 = arith.constant 0 : index
    %2 = vector.load %arg9[%c0_3, %c0_4] : memref<128x8xf32, #tpu.memory_space<vmem>>, vector<128x8xf32>
    %c0_5 = arith.constant 0 : index
    %c0_6 = arith.constant 0 : index
    %3 = vector.load %arg8[%c0_5, %c0_6] : memref<1x64xf32, #tpu.memory_space<vmem>>, vector<1x64xf32>
    %4 = vector.shape_cast %3 : vector<1x64xf32> to vector<1x64xf32>
    %5 = vector.broadcast %4 : vector<1x64xf32> to vector<16x64xf32>
    %c0_7 = arith.constant 0 : index
    %c0_8 = arith.constant 0 : index
    %6 = vector.load %arg10[%c0_7, %c0_8] : memref<1x8xf32, #tpu.memory_space<vmem>>, vector<1x8xf32>
    %7 = vector.shape_cast %6 : vector<1x8xf32> to vector<1x8xf32>
    %8 = vector.broadcast %7 : vector<1x8xf32> to vector<16x8xf32>
    %c0_9 = arith.constant 0 : index
    %c0_10 = arith.constant 0 : index
    %9 = vector.load %arg1[%c0_9, %c0_10] : memref<16x64xf32, #tpu.memory_space<vmem>>, vector<16x64xf32>
    %c0_11 = arith.constant 0 : index
    %c0_12 = arith.constant 0 : index
    %10 = vector.load %arg3[%c0_11, %c0_12] : memref<64x256xf32, #tpu.memory_space<vmem>>, vector<64x256xf32>
    %cst = arith.constant dense<0.000000e+00> : vector<16x256xf32>
    %11 = tpu.matmul %9, %10, %cst {dimension_numbers = #tpu.dot_dimension_numbers<[1], [0], [0], [1], [0, 0, 1, 1], [], []>} : vector<16x64xf32>, vector<64x256xf32>, vector<16x256xf32> -> vector<16x256xf32>
    %c0_13 = arith.constant 0 : index
    %c0_14 = arith.constant 0 : index
    %12 = vector.load %arg4[%c0_13, %c0_14] : memref<1x256xf32, #tpu.memory_space<vmem>>, vector<1x256xf32>
    %13 = vector.broadcast %12 : vector<1x256xf32> to vector<16x256xf32>
    %14 = arith.addf %11, %13 : vector<16x256xf32>
    %cst_15 = arith.constant 0.000000e+00 : f32
    %15 = vector.broadcast %cst_15 : f32 to vector<16x256xf32>
    %16 = arith.maximumf %14, %15 : vector<16x256xf32>
    %c0_16 = arith.constant 0 : index
    %c0_17 = arith.constant 0 : index
    %17 = vector.load %arg5[%c0_16, %c0_17] : memref<256x8xf32, #tpu.memory_space<vmem>>, vector<256x8xf32>
    %cst_18 = arith.constant dense<0.000000e+00> : vector<16x8xf32>
    %18 = tpu.matmul %16, %17, %cst_18 {dimension_numbers = #tpu.dot_dimension_numbers<[1], [0], [0], [1], [0, 0, 1, 1], [], []>} : vector<16x256xf32>, vector<256x8xf32>, vector<16x8xf32> -> vector<16x8xf32>
    %c0_19 = arith.constant 0 : index
    %c0_20 = arith.constant 0 : index
    %19 = vector.load %arg6[%c0_19, %c0_20] : memref<1x8xf32, #tpu.memory_space<vmem>>, vector<1x8xf32>
    %20 = vector.broadcast %19 : vector<1x8xf32> to vector<16x8xf32>
    %21 = arith.addf %18, %20 : vector<16x8xf32>
    %c0_21 = arith.constant 0 : index
    %c0_22 = arith.constant 0 : index
    %c0_23 = arith.constant 0 : index
    %22 = vector.load %arg11[%c0_21, %c0_22, %c0_23] : memref<4x16x8xf32, #tpu.memory_space<vmem>>, vector<1x16x8xf32>
    %23 = vector.shape_cast %22 : vector<1x16x8xf32> to vector<16x8xf32>
    %24 = vector.shape_cast %21 : vector<16x8xf32> to vector<1x16x8xf32>
    tpu.vector_store %arg11[%c0_21, %c0_22, %c0_23], %24 {strides = array<i32>} : memref<4x16x8xf32, #tpu.memory_space<vmem>>, vector<1x16x8xf32>,
    %c0_i32 = arith.constant 0 : i32
    %25 = arith.index_cast %c0_i32 : i32 to index
    %26 = memref.load %arg0[%25] : memref<3xf32, #tpu.memory_space<smem>>
    %cst_24 = arith.constant dense<0.000000e+00> : vector<16x8xf32>
    %27 = tpu.matmul %0, %21, %cst_24 {dimension_numbers = #tpu.dot_dimension_numbers<[1], [0], [0], [1], [0, 0, 1, 1], [], []>} : vector<16x16xf32>, vector<16x8xf32>, vector<16x8xf32> -> vector<16x8xf32>
    %28 = tpu.concatenate %21, %27 in 1 : vector<16x8xf32>, vector<16x8xf32> -> vector<16x16xf32>
    %cst_25 = arith.constant dense<0.000000e+00> : vector<16x64xf32>
    %29 = tpu.matmul %28, %1, %cst_25 {dimension_numbers = #tpu.dot_dimension_numbers<[1], [0], [0], [1], [0, 0, 1, 1], [], []>} : vector<16x16xf32>, vector<16x64xf32>, vector<16x64xf32> -> vector<16x64xf32>
    %30 = arith.addf %29, %5 : vector<16x64xf32>
    %cst_26 = arith.constant 0.000000e+00 : f32
    %31 = vector.broadcast %cst_26 : f32 to vector<16x64xf32>
    %32 = arith.maximumf %30, %31 : vector<16x64xf32>
    %cst_27 = arith.constant dense<0.000000e+00> : vector<16x64xf32>
    %33 = tpu.matmul %0, %32, %cst_27 {dimension_numbers = #tpu.dot_dimension_numbers<[1], [0], [0], [1], [0, 0, 1, 1], [], []>} : vector<16x16xf32>, vector<16x64xf32>, vector<16x64xf32> -> vector<16x64xf32>
    %34 = tpu.concatenate %32, %33 in 1 : vector<16x64xf32>, vector<16x64xf32> -> vector<16x128xf32>
    %cst_28 = arith.constant dense<0.000000e+00> : vector<16x8xf32>
    %35 = tpu.matmul %34, %2, %cst_28 {dimension_numbers = #tpu.dot_dimension_numbers<[1], [0], [0], [1], [0, 0, 1, 1], [], []>} : vector<16x128xf32>, vector<128x8xf32>, vector<16x8xf32> -> vector<16x8xf32>
    %36 = arith.addf %35, %8 : vector<16x8xf32>
    %cst_29 = arith.constant -1.000000e+03 : f32
    %cst_30 = arith.constant 1.000000e+03 : f32
    %37 = vector.broadcast %cst_29 : f32 to vector<16x8xf32>
    %38 = arith.maximumf %37, %36 : vector<16x8xf32>
    %39 = vector.broadcast %cst_30 : f32 to vector<16x8xf32>
    %40 = arith.minimumf %39, %38 : vector<16x8xf32>
    %41 = vector.broadcast %26 : f32 to vector<16x8xf32>
    %42 = arith.mulf %41, %40 : vector<16x8xf32>
    %43 = arith.addf %21, %42 : vector<16x8xf32>
    %c1_i32 = arith.constant 1 : i32
    %44 = arith.addi %c0_i32, %c1_i32 : i32
    %45 = arith.index_cast %44 : i32 to index
    %c0_31 = arith.constant 0 : index
    %c0_32 = arith.constant 0 : index
    %46 = vector.load %arg11[%45, %c0_31, %c0_32] : memref<4x16x8xf32, #tpu.memory_space<vmem>>, vector<1x16x8xf32>
    %47 = vector.shape_cast %46 : vector<1x16x8xf32> to vector<16x8xf32>
    %48 = vector.shape_cast %43 : vector<16x8xf32> to vector<1x16x8xf32>
    tpu.vector_store %arg11[%45, %c0_31, %c0_32], %48 {strides = array<i32>} : memref<4x16x8xf32, #tpu.memory_space<vmem>>, vector<1x16x8xf32>,
    %c1_i32_33 = arith.constant 1 : i32
    %49 = arith.index_cast %c1_i32_33 : i32 to index
    %50 = memref.load %arg0[%49] : memref<3xf32, #tpu.memory_space<smem>>
    %cst_34 = arith.constant dense<0.000000e+00> : vector<16x8xf32>
    %51 = tpu.matmul %0, %43, %cst_34 {dimension_numbers = #tpu.dot_dimension_numbers<[1], [0], [0], [1], [0, 0, 1, 1], [], []>} : vector<16x16xf32>, vector<16x8xf32>, vector<16x8xf32> -> vector<16x8xf32>
    %52 = tpu.concatenate %43, %51 in 1 : vector<16x8xf32>, vector<16x8xf32> -> vector<16x16xf32>
    %cst_35 = arith.constant dense<0.000000e+00> : vector<16x64xf32>
    %53 = tpu.matmul %52, %1, %cst_35 {dimension_numbers = #tpu.dot_dimension_numbers<[1], [0], [0], [1], [0, 0, 1, 1], [], []>} : vector<16x16xf32>, vector<16x64xf32>, vector<16x64xf32> -> vector<16x64xf32>
    %54 = arith.addf %53, %5 : vector<16x64xf32>
    %cst_36 = arith.constant 0.000000e+00 : f32
    %55 = vector.broadcast %cst_36 : f32 to vector<16x64xf32>
    %56 = arith.maximumf %54, %55 : vector<16x64xf32>
    %cst_37 = arith.constant dense<0.000000e+00> : vector<16x64xf32>
    %57 = tpu.matmul %0, %56, %cst_37 {dimension_numbers = #tpu.dot_dimension_numbers<[1], [0], [0], [1], [0, 0, 1, 1], [], []>} : vector<16x16xf32>, vector<16x64xf32>, vector<16x64xf32> -> vector<16x64xf32>
    %58 = tpu.concatenate %56, %57 in 1 : vector<16x64xf32>, vector<16x64xf32> -> vector<16x128xf32>
    %cst_38 = arith.constant dense<0.000000e+00> : vector<16x8xf32>
    %59 = tpu.matmul %58, %2, %cst_38 {dimension_numbers = #tpu.dot_dimension_numbers<[1], [0], [0], [1], [0, 0, 1, 1], [], []>} : vector<16x128xf32>, vector<128x8xf32>, vector<16x8xf32> -> vector<16x8xf32>
    %60 = arith.addf %59, %8 : vector<16x8xf32>
    %cst_39 = arith.constant -1.000000e+03 : f32
    %cst_40 = arith.constant 1.000000e+03 : f32
    %61 = vector.broadcast %cst_39 : f32 to vector<16x8xf32>
    %62 = arith.maximumf %61, %60 : vector<16x8xf32>
    %63 = vector.broadcast %cst_40 : f32 to vector<16x8xf32>
    %64 = arith.minimumf %63, %62 : vector<16x8xf32>
    %65 = vector.broadcast %50 : f32 to vector<16x8xf32>
    %66 = arith.mulf %65, %64 : vector<16x8xf32>
    %67 = arith.addf %43, %66 : vector<16x8xf32>
    %c1_i32_41 = arith.constant 1 : i32
    %68 = arith.addi %c1_i32_33, %c1_i32_41 : i32
    %69 = arith.index_cast %68 : i32 to index
    %c0_42 = arith.constant 0 : index
    %c0_43 = arith.constant 0 : index
    %70 = vector.load %arg11[%69, %c0_42, %c0_43] : memref<4x16x8xf32, #tpu.memory_space<vmem>>, vector<1x16x8xf32>
    %71 = vector.shape_cast %70 : vector<1x16x8xf32> to vector<16x8xf32>
    %72 = vector.shape_cast %67 : vector<16x8xf32> to vector<1x16x8xf32>
    tpu.vector_store %arg11[%69, %c0_42, %c0_43], %72 {strides = array<i32>} : memref<4x16x8xf32, #tpu.memory_space<vmem>>, vector<1x16x8xf32>,
    %c2_i32 = arith.constant 2 : i32
    %73 = arith.index_cast %c2_i32 : i32 to index
    %74 = memref.load %arg0[%73] : memref<3xf32, #tpu.memory_space<smem>>
    %cst_44 = arith.constant dense<0.000000e+00> : vector<16x8xf32>
    %75 = tpu.matmul %0, %67, %cst_44 {dimension_numbers = #tpu.dot_dimension_numbers<[1], [0], [0], [1], [0, 0, 1, 1], [], []>} : vector<16x16xf32>, vector<16x8xf32>, vector<16x8xf32> -> vector<16x8xf32>
    %76 = tpu.concatenate %67, %75 in 1 : vector<16x8xf32>, vector<16x8xf32> -> vector<16x16xf32>
    %cst_45 = arith.constant dense<0.000000e+00> : vector<16x64xf32>
    %77 = tpu.matmul %76, %1, %cst_45 {dimension_numbers = #tpu.dot_dimension_numbers<[1], [0], [0], [1], [0, 0, 1, 1], [], []>} : vector<16x16xf32>, vector<16x64xf32>, vector<16x64xf32> -> vector<16x64xf32>
    %78 = arith.addf %77, %5 : vector<16x64xf32>
    %cst_46 = arith.constant 0.000000e+00 : f32
    %79 = vector.broadcast %cst_46 : f32 to vector<16x64xf32>
    %80 = arith.maximumf %78, %79 : vector<16x64xf32>
    %cst_47 = arith.constant dense<0.000000e+00> : vector<16x64xf32>
    %81 = tpu.matmul %0, %80, %cst_47 {dimension_numbers = #tpu.dot_dimension_numbers<[1], [0], [0], [1], [0, 0, 1, 1], [], []>} : vector<16x16xf32>, vector<16x64xf32>, vector<16x64xf32> -> vector<16x64xf32>
    %82 = tpu.concatenate %80, %81 in 1 : vector<16x64xf32>, vector<16x64xf32> -> vector<16x128xf32>
    %cst_48 = arith.constant dense<0.000000e+00> : vector<16x8xf32>
    %83 = tpu.matmul %82, %2, %cst_48 {dimension_numbers = #tpu.dot_dimension_numbers<[1], [0], [0], [1], [0, 0, 1, 1], [], []>} : vector<16x128xf32>, vector<128x8xf32>, vector<16x8xf32> -> vector<16x8xf32>
    %84 = arith.addf %83, %8 : vector<16x8xf32>
    %cst_49 = arith.constant -1.000000e+03 : f32
    %cst_50 = arith.constant 1.000000e+03 : f32
    %85 = vector.broadcast %cst_49 : f32 to vector<16x8xf32>
    %86 = arith.maximumf %85, %84 : vector<16x8xf32>
    %87 = vector.broadcast %cst_50 : f32 to vector<16x8xf32>
    %88 = arith.minimumf %87, %86 : vector<16x8xf32>
    %89 = vector.broadcast %74 : f32 to vector<16x8xf32>
    %90 = arith.mulf %89, %88 : vector<16x8xf32>
    %91 = arith.addf %67, %90 : vector<16x8xf32>
    %c1_i32_51 = arith.constant 1 : i32
    %92 = arith.addi %c2_i32, %c1_i32_51 : i32
    %93 = arith.index_cast %92 : i32 to index
    %c0_52 = arith.constant 0 : index
    %c0_53 = arith.constant 0 : index
    %94 = vector.load %arg11[%93, %c0_52, %c0_53] : memref<4x16x8xf32, #tpu.memory_space<vmem>>, vector<1x16x8xf32>
    %95 = vector.shape_cast %94 : vector<1x16x8xf32> to vector<16x8xf32>
    %96 = vector.shape_cast %91 : vector<16x8xf32> to vector<1x16x8xf32>
    tpu.vector_store %arg11[%93, %c0_52, %c0_53], %96 {strides = array<i32>} : memref<4x16x8xf32, #tpu.memory_space<vmem>>, vector<1x16x8xf32>,
    %c3_i32 = arith.constant 3 : i32
    return
  }
}

</mosaic_0001>

<llo_original>
// kernel: tpu_custom_call.1
$region0: #{tpu_custom_call.1}
  #allocation0 [shape = 'u32[]', space=smem, size = 0x4, offset = 0x4, fixed_abs, tag = 'smem constant byte address 0x4 - core index']
  #allocation1 [shape = 'u32[72,128]{1,0:T(1,128)}', space=vmem, size = 0x9000, scoped, tag = 'internal scratch']
  %s0 = inlined_call_operand.vmem [shape: f32[3], index: 0, kind: input, shape index: {}]
  %s1 = inlined_call_operand.vmem [shape: f32[16,64], index: 1, kind: input, shape index: {}]
  %s2 = inlined_call_operand.vmem [shape: f32[16,16], index: 2, kind: input, shape index: {}]
  %s3 = inlined_call_operand.vmem [shape: f32[64,256], index: 3, kind: input, shape index: {}]
  %s4 = inlined_call_operand.vmem [shape: f32[1,256], index: 4, kind: input, shape index: {}]
  %s5 = inlined_call_operand.vmem [shape: f32[256,8], index: 5, kind: input, shape index: {}]
  %s6 = inlined_call_operand.vmem [shape: f32[1,8], index: 6, kind: input, shape index: {}]
  %s7 = inlined_call_operand.vmem [shape: f32[16,64], index: 7, kind: input, shape index: {}]
  %s8 = inlined_call_operand.vmem [shape: f32[1,64], index: 8, kind: input, shape index: {}]
  %s9 = inlined_call_operand.vmem [shape: f32[128,8], index: 9, kind: input, shape index: {}]
  %s10 = inlined_call_operand.vmem [shape: f32[1,8], index: 10, kind: input, shape index: {}]
  %s11 = inlined_call_operand.vmem [shape: f32[4,16,8], index: 11, kind: output, shape index: {}]
  %s12 = sld [smem:[#allocation0]]
  $region58: #{tpu_custom_call.1} parent=0
    _
  %s14 = ssub.s32 1, %s12
  %s15 = scalar_select 0, %s14, %s12
  $region1: #{tpu_custom_call.1} parent=0
    #allocation2 [shape = 'u8[512]{0}', space=smem, size = 0x200, scoped, tag = 'input window, operand 0, single buffered']
    #allocation3 [shape = 's32[1]{0}', space=sflag, size = 0x4, scoped, tag = 'scoped memory for tpu_custom_call.1']
    %16 = vsyncpa [#allocation3], 0
    // Predicated region
    $region2: #{tpu_custom_call.1} parent=1 // pred_check
      _
    $region3: #{tpu_custom_call.1} parent=1 // pred_check_branch
      %18 = sbr.rel (0) target = $region5
    $region4: #{tpu_custom_call.1} parent=1 // pred_region
      %20 = vsyncadd [#allocation3], 0
      %s22 = sshll.u32 %s0, 4
      %s23 = int_to_ptr.vmem [resolvable:$true] %s22
      %25 = dma.vmem_to_smem %s23, 16, [#allocation2], [#allocation3]
    $region5: #{tpu_custom_call.1} parent=1 // pred_fallthru
      _
    // Predicated region
    $region6: #{tpu_custom_call.1} parent=1 // pred_check
      _
    $region7: #{tpu_custom_call.1} parent=1 // pred_check_branch
      %27 = sbr.rel (0) target = $region9
    $region8: #{tpu_custom_call.1} parent=1 // pred_region
      _
    $region9: #{tpu_custom_call.1} parent=1 // pred_fallthru
      _
    // Predicated region
    $region10: #{tpu_custom_call.1} parent=1 // pred_check
      _
    $region11: #{tpu_custom_call.1} parent=1 // pred_check_branch
      %29 = sbr.rel (0) target = $region13
    $region12: #{tpu_custom_call.1} parent=1 // pred_region
      _
    $region13: #{tpu_custom_call.1} parent=1 // pred_fallthru
      _
    // Predicated region
    $region14: #{tpu_custom_call.1} parent=1 // pred_check
      _
    $region15: #{tpu_custom_call.1} parent=1 // pred_check_branch
      %31 = sbr.rel (0) target = $region17
    $region16: #{tpu_custom_call.1} parent=1 // pred_region
      _
    $region17: #{tpu_custom_call.1} parent=1 // pred_fallthru
      _
    // Predicated region
    $region18: #{tpu_custom_call.1} parent=1 // pred_check
      _
    $region19: #{tpu_custom_call.1} parent=1 // pred_check_branch
      %33 = sbr.rel (0) target = $region21
    $region20: #{tpu_custom_call.1} parent=1 // pred_region
      _
    $region21: #{tpu_custom_call.1} parent=1 // pred_fallthru
      _
    // Predicated region
    $region22: #{tpu_custom_call.1} parent=1 // pred_check
      _
    $region23: #{tpu_custom_call.1} parent=1 // pred_check_branch
      %35 = sbr.rel (0) target = $region25
    $region24: #{tpu_custom_call.1} parent=1 // pred_region
      _
    $region25: #{tpu_custom_call.1} parent=1 // pred_fallthru
      _
    // Predicated region
    $region26: #{tpu_custom_call.1} parent=1 // pred_check
      _
    $region27: #{tpu_custom_call.1} parent=1 // pred_check_branch
      %37 = sbr.rel (0) target = $region29
    $region28: #{tpu_custom_call.1} parent=1 // pred_region
      _
    $region29: #{tpu_custom_call.1} parent=1 // pred_fallthru
      _
    // Predicated region
    $region30: #{tpu_custom_call.1} parent=1 // pred_check
      _
    $region31: #{tpu_custom_call.1} parent=1 // pred_check_branch
      %39 = sbr.rel (0) target = $region33
    $region32: #{tpu_custom_call.1} parent=1 // pred_region
      _
    $region33: #{tpu_custom_call.1} parent=1 // pred_fallthru
      _
    // Predicated region
    $region34: #{tpu_custom_call.1} parent=1 // pred_check
      _
    $region35: #{tpu_custom_call.1} parent=1 // pred_check_branch
      %41 = sbr.rel (0) target = $region37
    $region36: #{tpu_custom_call.1} parent=1 // pred_region
      _
    $region37: #{tpu_custom_call.1} parent=1 // pred_fallthru
      _
    // Predicated region
    $region38: #{tpu_custom_call.1} parent=1 // pred_check
      _
    $region39: #{tpu_custom_call.1} parent=1 // pred_check_branch
      %43 = sbr.rel (0) target = $region41
    $region40: #{tpu_custom_call.1} parent=1 // pred_region
      _
    $region41: #{tpu_custom_call.1} parent=1 // pred_fallthru
      _
    // Predicated region
    $region42: #{tpu_custom_call.1} parent=1 // pred_check
      _
    $region43: #{tpu_custom_call.1} parent=1 // pred_check_branch
      %45 = sbr.rel (0) target = $region45
    $region44: #{tpu_custom_call.1} parent=1 // pred_region
      _
    $region45: #{tpu_custom_call.1} parent=1 // pred_fallthru
      _
    // Predicated region
    $region46: #{tpu_custom_call.1} parent=1 // pred_check
      _
    $region47: #{tpu_custom_call.1} parent=1 // pred_check_branch
      %47 = sbr.rel (0) target = $region49
    $region48: #{tpu_custom_call.1} parent=1 // pred_region
      %49 = dma.done [#allocation3], 16
    $region49: #{tpu_custom_call.1} parent=1 // pred_fallthru
      _
    %50 = sfence
    %v51 = vld [vmem:[%s2] sm:$0xff]
    %v52 = vld [vmem:[%s2 + $0x8] sm:$0xff]
    %v53 = vld [vmem:[%s7] sm:$0xff]
    %v54 = vld [vmem:[%s7 + $0x8] sm:$0xff]
    %v55 = vld [vmem:[%s9] sm:$0xff]
    %v56 = vld [vmem:[%s9 + $0x8] sm:$0xff]
    %v57 = vld [vmem:[%s9 + $0x10] sm:$0xff]
    %v58 = vld [vmem:[%s9 + $0x18] sm:$0xff]
    %v59 = vld [vmem:[%s9 + $0x20] sm:$0xff]
    %v60 = vld [vmem:[%s9 + $0x28] sm:$0xff]
    %v61 = vld [vmem:[%s9 + $0x30] sm:$0xff]
    %v62 = vld [vmem:[%s9 + $0x38] sm:$0xff]
    %v63 = vld [vmem:[%s9 + $0x40] sm:$0xff]
    %v64 = vld [vmem:[%s9 + $0x48] sm:$0xff]
    %v65 = vld [vmem:[%s9 + $0x50] sm:$0xff]
    %v66 = vld [vmem:[%s9 + $0x58] sm:$0xff]
    %v67 = vld [vmem:[%s9 + $0x60] sm:$0xff]
    %v68 = vld [vmem:[%s9 + $0x68] sm:$0xff]
    %v69 = vld [vmem:[%s9 + $0x70] sm:$0xff]
    %v70 = vld [vmem:[%s9 + $0x78] sm:$0xff]
    %v71 = vld [vmem:[%s8] sm:$0x1]
    %v73 = vperm.slane %v71, 0
    %v75 = vld [vmem:[%s10] sm:$0x1]
    %v77 = vperm.slane %v75, 0
    %v79 = vld [vmem:[%s1] sm:$0xff]
    %v80 = vld [vmem:[%s1 + $0x8] sm:$0xff]
    %v81 = vld [vmem:[%s3] sm:$0xff]
    %v82 = vld [vmem:[%s3 + $0x8] sm:$0xff]
    %v83 = vld [vmem:[%s3 + $0x10] sm:$0xff]
    %v84 = vld [vmem:[%s3 + $0x18] sm:$0xff]
    %v85 = vld [vmem:[%s3 + $0x20] sm:$0xff]
    %v86 = vld [vmem:[%s3 + $0x28] sm:$0xff]
    %v87 = vld [vmem:[%s3 + $0x30] sm:$0xff]
    %v88 = vld [vmem:[%s3 + $0x38] sm:$0xff]
    %v89 = vld [vmem:[%s3 + $0x40] sm:$0xff]
    %v90 = vld [vmem:[%s3 + $0x48] sm:$0xff]
    %v91 = vld [vmem:[%s3 + $0x50] sm:$0xff]
    %v92 = vld [vmem:[%s3 + $0x58] sm:$0xff]
    %v93 = vld [vmem:[%s3 + $0x60] sm:$0xff]
    %v94 = vld [vmem:[%s3 + $0x68] sm:$0xff]
    %v95 = vld [vmem:[%s3 + $0x70] sm:$0xff]
    %v96 = vld [vmem:[%s3 + $0x78] sm:$0xff]
    %v97 = vld [vmem:[%s4] sm:$0x3]
    %v99 = vperm.slane %v97, 0
    %v100 = vperm.slane %v97, 1
    %vm103 = vcmask 523264
    %v105 = vsel %vm103, %v79, 0
    %v108 = vsel %vm103, %v80, 0
    %110 = vmatpush.msra.mxu0 0.0
    %111 = vmatpush.msra.mxu0 0.0
    %112 = vmatpush.msra.mxu0 0.0
    %113 = vmatpush.msra.mxu0 0.0
    %114 = vmatpush.msra.mxu0 0.0
    %115 = vmatpush.msra.mxu0 0.0
    %116 = vmatpush.msra.mxu0 0.0
    %117 = vmatpush.msra.mxu0 0.0
    %118 = vmatpush.msra.mxu0 %v95
    %119 = vmatpush.msra.mxu0 %v93
    %120 = vmatpush.msra.mxu0 %v91
    %121 = vmatpush.msra.mxu0 %v89
    %122 = vmatpush.msra.mxu0 %v87
    %123 = vmatpush.msra.mxu0 %v85
    %124 = vmatpush.msra.mxu0 %v83
    %125 = vmatpush.msra.mxu0 %v81
    %126 = vmatmul.f32.gmra.mxu0 %v105
    %v127 = vpop.f32.mrf.mxu0
    %v128 = vadd.f32 %v99, %v127
    %129 = vmatmul.f32.gmra.mxu0 %v108
    %v130 = vpop.f32.mrf.mxu0
    %v131 = vadd.f32 %v99, %v130
    %132 = vdwg.mxu0
    %133 = vmatpush.msra.mxu0 0.0
    %134 = vmatpush.msra.mxu0 0.0
    %135 = vmatpush.msra.mxu0 0.0
    %136 = vmatpush.msra.mxu0 0.0
    %137 = vmatpush.msra.mxu0 0.0
    %138 = vmatpush.msra.mxu0 0.0
    %139 = vmatpush.msra.mxu0 0.0
    %140 = vmatpush.msra.mxu0 0.0
    %141 = vmatpush.msra.mxu0 %v96
    %142 = vmatpush.msra.mxu0 %v94
    %143 = vmatpush.msra.mxu0 %v92
    %144 = vmatpush.msra.mxu0 %v90
    %145 = vmatpush.msra.mxu0 %v88
    %146 = vmatpush.msra.mxu0 %v86
    %147 = vmatpush.msra.mxu0 %v84
    %148 = vmatpush.msra.mxu0 %v82
    %149 = vmatmul.f32.gmra.mxu0 %v105
    %v150 = vpop.f32.mrf.mxu0
    %v151 = vadd.f32 %v100, %v150
    %152 = vmatmul.f32.gmra.mxu0 %v108
    %v153 = vpop.f32.mrf.mxu0
    %v154 = vadd.f32 %v100, %v153
    %155 = vdwg.mxu0
    %v156 = vmax.f32 %v128, 0.0
    %v157 = vmax.f32 %v151, 0.0
    %v158 = vmax.f32 %v131, 0.0
    %v159 = vmax.f32 %v154, 0.0
    %v160 = vld [vmem:[%s5] sm:$0xff]
    %v161 = vld [vmem:[%s5 + $0x8] sm:$0xff]
    %v162 = vld [vmem:[%s5 + $0x10] sm:$0xff]
    %v163 = vld [vmem:[%s5 + $0x18] sm:$0xff]
    %v164 = vld [vmem:[%s5 + $0x20] sm:$0xff]
    %v165 = vld [vmem:[%s5 + $0x28] sm:$0xff]
    %v166 = vld [vmem:[%s5 + $0x30] sm:$0xff]
    %v167 = vld [vmem:[%s5 + $0x38] sm:$0xff]
    %v168 = vld [vmem:[%s5 + $0x40] sm:$0xff]
    %v169 = vld [vmem:[%s5 + $0x48] sm:$0xff]
    %v170 = vld [vmem:[%s5 + $0x50] sm:$0xff]
    %v171 = vld [vmem:[%s5 + $0x58] sm:$0xff]
    %v172 = vld [vmem:[%s5 + $0x60] sm:$0xff]
    %v173 = vld [vmem:[%s5 + $0x68] sm:$0xff]
    %v174 = vld [vmem:[%s5 + $0x70] sm:$0xff]
    %v175 = vld [vmem:[%s5 + $0x78] sm:$0xff]
    %v176 = vld [vmem:[%s5 + $0x80] sm:$0xff]
    %v177 = vld [vmem:[%s5 + $0x88] sm:$0xff]
    %v178 = vld [vmem:[%s5 + $0x90] sm:$0xff]
    %v179 = vld [vmem:[%s5 + $0x98] sm:$0xff]
    %v180 = vld [vmem:[%s5 + $0xa0] sm:$0xff]
    %v181 = vld [vmem:[%s5 + $0xa8] sm:$0xff]
    %v182 = vld [vmem:[%s5 + $0xb0] sm:$0xff]
    %v183 = vld [vmem:[%s5 + $0xb8] sm:$0xff]
    %v184 = vld [vmem:[%s5 + $0xc0] sm:$0xff]
    %v185 = vld [vmem:[%s5 + $0xc8] sm:$0xff]
    %v186 = vld [vmem:[%s5 + $0xd0] sm:$0xff]
    %v187 = vld [vmem:[%s5 + $0xd8] sm:$0xff]
    %v188 = vld [vmem:[%s5 + $0xe0] sm:$0xff]
    %v189 = vld [vmem:[%s5 + $0xe8] sm:$0xff]
    %v190 = vld [vmem:[%s5 + $0xf0] sm:$0xff]
    %v191 = vld [vmem:[%s5 + $0xf8] sm:$0xff]
    %v192 = vld [vmem:[%s6] sm:$0x1]
    %v194 = vperm.slane %v192, 0
    %196 = vmatpush.msra.mxu0 %v175
    %197 = vmatpush.msra.mxu0 %v174
    %198 = vmatpush.msra.mxu0 %v173
    %199 = vmatpush.msra.mxu0 %v172
    %200 = vmatpush.msra.mxu0 %v171
    %201 = vmatpush.msra.mxu0 %v170
    %202 = vmatpush.msra.mxu0 %v169
    %203 = vmatpush.msra.mxu0 %v168
    %204 = vmatpush.msra.mxu0 %v167
    %205 = vmatpush.msra.mxu0 %v166
    %206 = vmatpush.msra.mxu0 %v165
    %207 = vmatpush.msra.mxu0 %v164
    %208 = vmatpush.msra.mxu0 %v163
    %209 = vmatpush.msra.mxu0 %v162
    %210 = vmatpush.msra.mxu0 %v161
    %211 = vmatpush.msra.mxu0 %v160
    %212 = vmatmul.f32.gmra.mxu0 %v156
    %v213 = vpop.f32.mrf.mxu0
    %v214 = vadd.f32 %v194, %v213
    %215 = vmatmul.f32.gmra.mxu0 %v158
    %v216 = vpop.f32.mrf.mxu0
    %v217 = vadd.f32 %v194, %v216
    %218 = vdwg.mxu0
    %219 = vmatpush.msra.mxu0 %v191
    %220 = vmatpush.msra.mxu0 %v190
    %221 = vmatpush.msra.mxu0 %v189
    %222 = vmatpush.msra.mxu0 %v188
    %223 = vmatpush.msra.mxu0 %v187
    %224 = vmatpush.msra.mxu0 %v186
    %225 = vmatpush.msra.mxu0 %v185
    %226 = vmatpush.msra.mxu0 %v184
    %227 = vmatpush.msra.mxu0 %v183
    %228 = vmatpush.msra.mxu0 %v182
    %229 = vmatpush.msra.mxu0 %v181
    %230 = vmatpush.msra.mxu0 %v180
    %231 = vmatpush.msra.mxu0 %v179
    %232 = vmatpush.msra.mxu0 %v178
    %233 = vmatpush.msra.mxu0 %v177
    %234 = vmatpush.msra.mxu0 %v176
    %235 = vmatmul.f32.gmra.mxu0 %v157
    %v236 = vpop.f32.mrf.mxu0
    %v237 = vadd.f32 %v214, %v236
    %238 = vmatmul.f32.gmra.mxu0 %v159
    %v239 = vpop.f32.mrf.mxu0
    %v240 = vadd.f32 %v217, %v239
    %241 = vdwg.mxu0
    %vm242 = vcmask 64512
    %243 = vst.msk [vmem:[%s11] sm:$0xff] %vm242, %v237
    %244 = vst.msk [vmem:[%s11 + $0x8] sm:$0xff] %vm242, %v240
    %s245 = sld [smem:[#allocation2]]
    %vm246 = vcmask 130048
    %v248 = vsel %vm246, %v51, 0
    %v251 = vsel %vm246, %v52, 0
    %253 = vmatpush.msra.mxu0 0.0
    %254 = vmatpush.msra.mxu0 0.0
    %255 = vmatpush.msra.mxu0 0.0
    %256 = vmatpush.msra.mxu0 0.0
    %257 = vmatpush.msra.mxu0 0.0
    %258 = vmatpush.msra.mxu0 0.0
    %259 = vmatpush.msra.mxu0 0.0
    %260 = vmatpush.msra.mxu0 0.0
    %261 = vmatpush.msra.mxu0 0.0
    %262 = vmatpush.msra.mxu0 0.0
    %263 = vmatpush.msra.mxu0 0.0
    %264 = vmatpush.msra.mxu0 0.0
    %265 = vmatpush.msra.mxu0 0.0
    %266 = vmatpush.msra.mxu0 0.0
    %267 = vmatpush.msra.mxu0 %v240
    %268 = vmatpush.msra.mxu0 %v237
    %269 = vmatmul.f32.gmra.mxu0 %v248
    %v270 = vpop.f32.mrf.mxu0
    %v271 = vadd.f32 0.0, %v270
    %272 = vmatmul.f32.gmra.mxu0 %v251
    %v273 = vpop.f32.mrf.mxu0
    %v274 = vadd.f32 0.0, %v273
    %275 = vdwg.mxu0
    %278 = vrot.lane.b32.xlu0 %v271, 8
    %v279 = vpop.permute.xlu0 %278
    %280 = vrot.lane.b32.xlu0 %v274, 8
    %v281 = vpop.permute.xlu0 %280
    %v284 = vsel %vm242, %v237, %v279
    %v285 = vsel %vm242, %v240, %v281
    %v287 = vsel %vm246, %v284, 0
    %v290 = vsel %vm246, %v285, 0
    %292 = vmatpush.msra.mxu0 0.0
    %293 = vmatpush.msra.mxu0 0.0
    %294 = vmatpush.msra.mxu0 0.0
    %295 = vmatpush.msra.mxu0 0.0
    %296 = vmatpush.msra.mxu0 0.0
    %297 = vmatpush.msra.mxu0 0.0
    %298 = vmatpush.msra.mxu0 0.0
    %299 = vmatpush.msra.mxu0 0.0
    %300 = vmatpush.msra.mxu0 0.0
    %301 = vmatpush.msra.mxu0 0.0
    %302 = vmatpush.msra.mxu0 0.0
    %303 = vmatpush.msra.mxu0 0.0
    %304 = vmatpush.msra.mxu0 0.0
    %305 = vmatpush.msra.mxu0 0.0
    %306 = vmatpush.msra.mxu0 %v54
    %307 = vmatpush.msra.mxu0 %v53
    %308 = vmatmul.f32.gmra.mxu0 %v287
    %v309 = vpop.f32.mrf.mxu0
    %v310 = vadd.f32 %v73, %v309
    %311 = vmatmul.f32.gmra.mxu0 %v290
    %v312 = vpop.f32.mrf.mxu0
    %v313 = vadd.f32 %v73, %v312
    %314 = vdwg.mxu0
    %v315 = vmax.f32 %v310, 0.0
    %v316 = vmax.f32 %v313, 0.0
    %317 = vmatpush.msra.mxu0 0.0
    %318 = vmatpush.msra.mxu0 0.0
    %319 = vmatpush.msra.mxu0 0.0
    %320 = vmatpush.msra.mxu0 0.0
    %321 = vmatpush.msra.mxu0 0.0
    %322 = vmatpush.msra.mxu0 0.0
    %323 = vmatpush.msra.mxu0 0.0
    %324 = vmatpush.msra.mxu0 0.0
    %325 = vmatpush.msra.mxu0 0.0
    %326 = vmatpush.msra.mxu0 0.0
    %327 = vmatpush.msra.mxu0 0.0
    %328 = vmatpush.msra.mxu0 0.0
    %329 = vmatpush.msra.mxu0 0.0
    %330 = vmatpush.msra.mxu0 0.0
    %331 = vmatpush.msra.mxu0 %v316
    %332 = vmatpush.msra.mxu0 %v315
    %333 = vmatmul.f32.gmra.mxu0 %v248
    %v334 = vpop.f32.mrf.mxu0
    %v335 = vadd.f32 0.0, %v334
    %336 = vmatmul.f32.gmra.mxu0 %v251
    %v337 = vpop.f32.mrf.mxu0
    %v338 = vadd.f32 0.0, %v337
    %339 = vdwg.mxu0
    %342 = vrot.lane.b32.xlu0 %v335, 64
    %v343 = vpop.permute.xlu0 %342
    %344 = vrot.lane.b32.xlu0 %v338, 64
    %v345 = vpop.permute.xlu0 %344
    %v348 = vsel %vm103, %v315, %v343
    %v349 = vsel %vm103, %v316, %v345
    %350 = vmatpush.msra.mxu0 %v70
    %351 = vmatpush.msra.mxu0 %v69
    %352 = vmatpush.msra.mxu0 %v68
    %353 = vmatpush.msra.mxu0 %v67
    %354 = vmatpush.msra.mxu0 %v66
    %355 = vmatpush.msra.mxu0 %v65
    %356 = vmatpush.msra.mxu0 %v64
    %357 = vmatpush.msra.mxu0 %v63
    %358 = vmatpush.msra.mxu0 %v62
    %359 = vmatpush.msra.mxu0 %v61
    %360 = vmatpush.msra.mxu0 %v60
    %361 = vmatpush.msra.mxu0 %v59
    %362 = vmatpush.msra.mxu0 %v58
    %363 = vmatpush.msra.mxu0 %v57
    %364 = vmatpush.msra.mxu0 %v56
    %365 = vmatpush.msra.mxu0 %v55
    %366 = vmatmul.f32.gmra.mxu0 %v348
    %v367 = vpop.f32.mrf.mxu0
    %v368 = vadd.f32 %v77, %v367
    %369 = vmatmul.f32.gmra.mxu0 %v349
    %v370 = vpop.f32.mrf.mxu0
    %v371 = vadd.f32 %v77, %v370
    %372 = vdwg.mxu0
    %v373 = vmax.f32 %v368, -1000.0
    %v374 = vmax.f32 %v371, -1000.0
    %v375 = vmin.f32 %v373, 1000.0
    %v376 = vmin.f32 %v374, 1000.0
    %v377 = vstv %s245
    %v378 = vmul.f32 %v377, %v375
    %v379 = vmul.f32 %v377, %v376
    %v380 = vadd.f32 %v237, %v378
    %v381 = vadd.f32 %v240, %v379
    %s382 = scalar_lea.vmem %s11, 16
    %383 = vst.msk [vmem:[%s382] sm:$0xff] %vm242, %v380
    %384 = vst.msk [vmem:[%s382 + $0x8] sm:$0xff] %vm242, %v381
    %s385 = sld [smem:[#allocation2 + $0x1]]
    %386 = vmatpush.msra.mxu0 0.0
    %387 = vmatpush.msra.mxu0 0.0
    %388 = vmatpush.msra.mxu0 0.0
    %389 = vmatpush.msra.mxu0 0.0
    %390 = vmatpush.msra.mxu0 0.0
    %391 = vmatpush.msra.mxu0 0.0
    %392 = vmatpush.msra.mxu0 0.0
    %393 = vmatpush.msra.mxu0 0.0
    %394 = vmatpush.msra.mxu0 0.0
    %395 = vmatpush.msra.mxu0 0.0
    %396 = vmatpush.msra.mxu0 0.0
    %397 = vmatpush.msra.mxu0 0.0
    %398 = vmatpush.msra.mxu0 0.0
    %399 = vmatpush.msra.mxu0 0.0
    %400 = vmatpush.msra.mxu0 %v381
    %401 = vmatpush.msra.mxu0 %v380
    %402 = vmatmul.f32.gmra.mxu0 %v248
    %v403 = vpop.f32.mrf.mxu0
    %v404 = vadd.f32 0.0, %v403
    %405 = vmatmul.f32.gmra.mxu0 %v251
    %v406 = vpop.f32.mrf.mxu0
    %v407 = vadd.f32 0.0, %v406
    %408 = vdwg.mxu0
    %411 = vrot.lane.b32.xlu0 %v404, 8
    %v412 = vpop.permute.xlu0 %411
    %413 = vrot.lane.b32.xlu0 %v407, 8
    %v414 = vpop.permute.xlu0 %413
    %v417 = vsel %vm242, %v380, %v412
    %v418 = vsel %vm242, %v381, %v414
    %v420 = vsel %vm246, %v417, 0
    %v423 = vsel %vm246, %v418, 0
    %425 = vmatpush.msra.mxu0 0.0
    %426 = vmatpush.msra.mxu0 0.0
    %427 = vmatpush.msra.mxu0 0.0
    %428 = vmatpush.msra.mxu0 0.0
    %429 = vmatpush.msra.mxu0 0.0
    %430 = vmatpush.msra.mxu0 0.0
    %431 = vmatpush.msra.mxu0 0.0
    %432 = vmatpush.msra.mxu0 0.0
    %433 = vmatpush.msra.mxu0 0.0
    %434 = vmatpush.msra.mxu0 0.0
    %435 = vmatpush.msra.mxu0 0.0
    %436 = vmatpush.msra.mxu0 0.0
    %437 = vmatpush.msra.mxu0 0.0
    %438 = vmatpush.msra.mxu0 0.0
    %439 = vmatpush.msra.mxu0 %v54
    %440 = vmatpush.msra.mxu0 %v53
    %441 = vmatmul.f32.gmra.mxu0 %v420
    %v442 = vpop.f32.mrf.mxu0
    %v443 = vadd.f32 %v73, %v442
    %444 = vmatmul.f32.gmra.mxu0 %v423
    %v445 = vpop.f32.mrf.mxu0
    %v446 = vadd.f32 %v73, %v445
    %447 = vdwg.mxu0
    %v448 = vmax.f32 %v443, 0.0
    %v449 = vmax.f32 %v446, 0.0
    %450 = vmatpush.msra.mxu0 0.0
    %451 = vmatpush.msra.mxu0 0.0
    %452 = vmatpush.msra.mxu0 0.0
    %453 = vmatpush.msra.mxu0 0.0
    %454 = vmatpush.msra.mxu0 0.0
    %455 = vmatpush.msra.mxu0 0.0
    %456 = vmatpush.msra.mxu0 0.0
    %457 = vmatpush.msra.mxu0 0.0
    %458 = vmatpush.msra.mxu0 0.0
    %459 = vmatpush.msra.mxu0 0.0
    %460 = vmatpush.msra.mxu0 0.0
    %461 = vmatpush.msra.mxu0 0.0
    %462 = vmatpush.msra.mxu0 0.0
    %463 = vmatpush.msra.mxu0 0.0
    %464 = vmatpush.msra.mxu0 %v449
    %465 = vmatpush.msra.mxu0 %v448
    %466 = vmatmul.f32.gmra.mxu0 %v248
    %v467 = vpop.f32.mrf.mxu0
    %v468 = vadd.f32 0.0, %v467
    %469 = vmatmul.f32.gmra.mxu0 %v251
    %v470 = vpop.f32.mrf.mxu0
    %v471 = vadd.f32 0.0, %v470
    %472 = vdwg.mxu0
    %475 = vrot.lane.b32.xlu0 %v468, 64
    %v476 = vpop.permute.xlu0 %475
    %477 = vrot.lane.b32.xlu0 %v471, 64
    %v478 = vpop.permute.xlu0 %477
    %v481 = vsel %vm103, %v448, %v476
    %v482 = vsel %vm103, %v449, %v478
    %483 = vmatpush.msra.mxu0 %v70
    %484 = vmatpush.msra.mxu0 %v69
    %485 = vmatpush.msra.mxu0 %v68
    %486 = vmatpush.msra.mxu0 %v67
    %487 = vmatpush.msra.mxu0 %v66
    %488 = vmatpush.msra.mxu0 %v65
    %489 = vmatpush.msra.mxu0 %v64
    %490 = vmatpush.msra.mxu0 %v63
    %491 = vmatpush.msra.mxu0 %v62
    %492 = vmatpush.msra.mxu0 %v61
    %493 = vmatpush.msra.mxu0 %v60
    %494 = vmatpush.msra.mxu0 %v59
    %495 = vmatpush.msra.mxu0 %v58
    %496 = vmatpush.msra.mxu0 %v57
    %497 = vmatpush.msra.mxu0 %v56
    %498 = vmatpush.msra.mxu0 %v55
    %499 = vmatmul.f32.gmra.mxu0 %v481
    %v500 = vpop.f32.mrf.mxu0
    %v501 = vadd.f32 %v77, %v500
    %502 = vmatmul.f32.gmra.mxu0 %v482
    %v503 = vpop.f32.mrf.mxu0
    %v504 = vadd.f32 %v77, %v503
    %505 = vdwg.mxu0
    %v506 = vmax.f32 %v501, -1000.0
    %v507 = vmax.f32 %v504, -1000.0
    %v508 = vmin.f32 %v506, 1000.0
    %v509 = vmin.f32 %v507, 1000.0
    %v510 = vstv %s385
    %v511 = vmul.f32 %v510, %v508
    %v512 = vmul.f32 %v510, %v509
    %v513 = vadd.f32 %v380, %v511
    %v514 = vadd.f32 %v381, %v512
    %s515 = scalar_lea.vmem %s11, 32
    %516 = vst.msk [vmem:[%s515] sm:$0xff] %vm242, %v513
    %517 = vst.msk [vmem:[%s515 + $0x8] sm:$0xff] %vm242, %v514
    %s518 = sld [smem:[#allocation2 + $0x2]]
    %519 = vmatpush.msra.mxu0 0.0
    %520 = vmatpush.msra.mxu0 0.0
    %521 = vmatpush.msra.mxu0 0.0
    %522 = vmatpush.msra.mxu0 0.0
    %523 = vmatpush.msra.mxu0 0.0
    %524 = vmatpush.msra.mxu0 0.0
    %525 = vmatpush.msra.mxu0 0.0
    %526 = vmatpush.msra.mxu0 0.0
    %527 = vmatpush.msra.mxu0 0.0
    %528 = vmatpush.msra.mxu0 0.0
    %529 = vmatpush.msra.mxu0 0.0
    %530 = vmatpush.msra.mxu0 0.0
    %531 = vmatpush.msra.mxu0 0.0
    %532 = vmatpush.msra.mxu0 0.0
    %533 = vmatpush.msra.mxu0 %v514
    %534 = vmatpush.msra.mxu0 %v513
    %535 = vmatmul.f32.gmra.mxu0 %v248
    %v536 = vpop.f32.mrf.mxu0
    %v537 = vadd.f32 0.0, %v536
    %538 = vmatmul.f32.gmra.mxu0 %v251
    %v539 = vpop.f32.mrf.mxu0
    %v540 = vadd.f32 0.0, %v539
    %541 = vdwg.mxu0
    %544 = vrot.lane.b32.xlu0 %v537, 8
    %v545 = vpop.permute.xlu0 %544
    %546 = vrot.lane.b32.xlu0 %v540, 8
    %v547 = vpop.permute.xlu0 %546
    %v550 = vsel %vm242, %v513, %v545
    %v551 = vsel %vm242, %v514, %v547
    %v553 = vsel %vm246, %v550, 0
    %v556 = vsel %vm246, %v551, 0
    %558 = vmatpush.msra.mxu0 0.0
    %559 = vmatpush.msra.mxu0 0.0
    %560 = vmatpush.msra.mxu0 0.0
    %561 = vmatpush.msra.mxu0 0.0
    %562 = vmatpush.msra.mxu0 0.0
    %563 = vmatpush.msra.mxu0 0.0
    %564 = vmatpush.msra.mxu0 0.0
    %565 = vmatpush.msra.mxu0 0.0
    %566 = vmatpush.msra.mxu0 0.0
    %567 = vmatpush.msra.mxu0 0.0
    %568 = vmatpush.msra.mxu0 0.0
    %569 = vmatpush.msra.mxu0 0.0
    %570 = vmatpush.msra.mxu0 0.0
    %571 = vmatpush.msra.mxu0 0.0
    %572 = vmatpush.msra.mxu0 %v54
    %573 = vmatpush.msra.mxu0 %v53
    %574 = vmatmul.f32.gmra.mxu0 %v553
    %v575 = vpop.f32.mrf.mxu0
    %v576 = vadd.f32 %v73, %v575
    %577 = vmatmul.f32.gmra.mxu0 %v556
    %v578 = vpop.f32.mrf.mxu0
    %v579 = vadd.f32 %v73, %v578
    %580 = vdwg.mxu0
    %v581 = vmax.f32 %v576, 0.0
    %v582 = vmax.f32 %v579, 0.0
    %583 = vmatpush.msra.mxu0 0.0
    %584 = vmatpush.msra.mxu0 0.0
    %585 = vmatpush.msra.mxu0 0.0
    %586 = vmatpush.msra.mxu0 0.0
    %587 = vmatpush.msra.mxu0 0.0
    %588 = vmatpush.msra.mxu0 0.0
    %589 = vmatpush.msra.mxu0 0.0
    %590 = vmatpush.msra.mxu0 0.0
    %591 = vmatpush.msra.mxu0 0.0
    %592 = vmatpush.msra.mxu0 0.0
    %593 = vmatpush.msra.mxu0 0.0
    %594 = vmatpush.msra.mxu0 0.0
    %595 = vmatpush.msra.mxu0 0.0
    %596 = vmatpush.msra.mxu0 0.0
    %597 = vmatpush.msra.mxu0 %v582
    %598 = vmatpush.msra.mxu0 %v581
    %599 = vmatmul.f32.gmra.mxu0 %v248
    %v600 = vpop.f32.mrf.mxu0
    %v601 = vadd.f32 0.0, %v600
    %602 = vmatmul.f32.gmra.mxu0 %v251
    %v603 = vpop.f32.mrf.mxu0
    %v604 = vadd.f32 0.0, %v603
    %605 = vdwg.mxu0
    %608 = vrot.lane.b32.xlu0 %v601, 64
    %v609 = vpop.permute.xlu0 %608
    %610 = vrot.lane.b32.xlu0 %v604, 64
    %v611 = vpop.permute.xlu0 %610
    %v614 = vsel %vm103, %v581, %v609
    %v615 = vsel %vm103, %v582, %v611
    %616 = vmatpush.msra.mxu0 %v70
    %617 = vmatpush.msra.mxu0 %v69
    %618 = vmatpush.msra.mxu0 %v68
    %619 = vmatpush.msra.mxu0 %v67
    %620 = vmatpush.msra.mxu0 %v66
    %621 = vmatpush.msra.mxu0 %v65
    %622 = vmatpush.msra.mxu0 %v64
    %623 = vmatpush.msra.mxu0 %v63
    %624 = vmatpush.msra.mxu0 %v62
    %625 = vmatpush.msra.mxu0 %v61
    %626 = vmatpush.msra.mxu0 %v60
    %627 = vmatpush.msra.mxu0 %v59
    %628 = vmatpush.msra.mxu0 %v58
    %629 = vmatpush.msra.mxu0 %v57
    %630 = vmatpush.msra.mxu0 %v56
    %631 = vmatpush.msra.mxu0 %v55
    %632 = vmatmul.f32.gmra.mxu0 %v614
    %v633 = vpop.f32.mrf.mxu0
    %v634 = vadd.f32 %v77, %v633
    %635 = vmatmul.f32.gmra.mxu0 %v615
    %v636 = vpop.f32.mrf.mxu0
    %v637 = vadd.f32 %v77, %v636
    %638 = vdwg.mxu0
    %v639 = vmax.f32 %v634, -1000.0
    %v640 = vmax.f32 %v637, -1000.0
    %v641 = vmin.f32 %v639, 1000.0
    %v642 = vmin.f32 %v640, 1000.0
    %v643 = vstv %s518
    %v644 = vmul.f32 %v643, %v641
    %v645 = vmul.f32 %v643, %v642
    %v646 = vadd.f32 %v513, %v644
    %v647 = vadd.f32 %v514, %v645
    %s648 = scalar_lea.vmem %s11, 48
    %649 = vst.msk [vmem:[%s648] sm:$0xff] %vm242, %v646
    %650 = vst.msk [vmem:[%s648 + $0x8] sm:$0xff] %vm242, %v647
    // Predicated region
    $region50: #{tpu_custom_call.1} parent=1 // pred_check
      _
    $region51: #{tpu_custom_call.1} parent=1 // pred_check_branch
      %652 = sbr.rel (0) target = $region53
    $region52: #{tpu_custom_call.1} parent=1 // pred_region
      _
    $region53: #{tpu_custom_call.1} parent=1 // pred_fallthru
      _
    // Predicated region
    $region54: #{tpu_custom_call.1} parent=1 // pred_check
      _
    $region55: #{tpu_custom_call.1} parent=1 // pred_check_branch
      %654 = sbr.rel (0) target = $region57
    $region56: #{tpu_custom_call.1} parent=1 // pred_region
      _
    $region57: #{tpu_custom_call.1} parent=1 // pred_fallthru
      _
    %655 = vsyncpa [#allocation3], 1

</llo_original>
